<compile_context>
chip_gen: v5e
topology: v5e:2x2
jax: 0.10.0
libtpu: 0.0.40
codegen_flags: <defaults>
</compile_context>

<pallas_src>
import functools

import jax
import jax.numpy as jnp
from jax import lax
from jax.experimental import pallas as pl
from jax.experimental.pallas import tpu as pltpu


def _round_up(a, b):
    return (a + b - 1) // b * b


def _round_down(a, b):
    return a // b * b


def _lane_util(width):
    return width / _round_up(width, 128)


def _choose_pack(rows, hw):
    """Rows packed per kernel row (lane densification for small H*W).

    An (TM, hw) block with hw = 49/196/... wastes most of every vreg's 128
    lanes, pushing the bottleneck from HBM onto the single-slot EUP.  Packing
    g rows per kernel row is a free row-major reshape in HBM (no extra pass)
    and restores lane density; g must divide rows so the reshape is exact.
    """
    if hw % 128 == 0 or hw >= 1024:
        return 1
    base = _lane_util(hw)
    max_g = min(rows, max(1, 2048 // hw))
    for g in range(max_g, 1, -1):
        if rows % g == 0 and _lane_util(g * hw) > base:
            return g
    return 1


def _choose_row_tile(rows_packed, row_bytes):
    """Packed rows per grid step.

    ~4 MiB per pipeline buffer (double-buffered input stays well inside the
    scoped-VMEM budget on v5e/v6e/v7x), capped so the grid keeps >= 2 steps
    whenever possible (v7x megacore sharding + DMA/compute overlap).  Never
    below 8 rows (sublane tiling rule).
    """
    per_buf_budget = 4 * 1024 * 1024
    tm_vmem = max(8, _round_down(per_buf_budget // max(row_bytes, 1), 8))
    tm_steps = max(8, _round_down((rows_packed + 1) // 2, 8))
    return min(tm_vmem, tm_steps)


def _gem_kernel(p_ref, *refs, eps, inv_hw, n_seg):
    """One row tile of GeM.

    p_ref : SMEM (1,) f32 (scalar prefetch)            -- learned p
    x_ref : VMEM (TM, n_seg*hw) input tile (n_seg logical rows per kernel row)
    seg_ref (only when n_seg > 1): VMEM (n_seg*hw, n_seg) 0/1 segment matrix
    o_ref : VMEM (TM, n_seg) per-logical-row GeM results
    """
    if n_seg > 1:
        x_ref, seg_ref, o_ref = refs
    else:
        x_ref, o_ref = refs

    p = p_ref[0]
    inv_p = 1.0 / p                                          # scalar path
    x = jnp.maximum(x_ref[...].astype(jnp.float32), eps)     # clamp(min=eps)  (VPU)
    xp = jnp.exp(jnp.log(x) * p)                             # x ** p, runtime p (EUP)

    if n_seg > 1:
        # Segmented per-row sums as a 0/1 indicator matmul on the idle MXU:
        # (TM, g*hw) @ (g*hw, g) -> (TM, g).  HIGHEST keeps f32 accuracy.
        s = jnp.dot(xp, seg_ref[...],
                    preferred_element_type=jnp.float32,
                    precision=lax.Precision.HIGHEST)
    else:
        s = jnp.sum(xp, axis=-1, keepdims=True)              # lane reduce (XLU)

    m = s * inv_hw                                            # mean over H*W
    o_ref[...] = jnp.exp(jnp.log(m) * inv_p).astype(o_ref.dtype)   # m ** (1/p)


def gem_pallas(x, p, eps=1e-6):
    """GeM pooling.  x: (N, C, H, W) f32/bf16, p: (1,) f32 -> (N, C, 1, 1)."""
    N, C, H, W = x.shape
    rows, hw = N * C, H * W
    elem_bytes = jnp.dtype(x.dtype).itemsize

    # Lane densification for small H*W (free row-major reshape, no HBM pass).
    g = _choose_pack(rows, hw)
    rows_packed = rows // g
    xf = x.reshape(rows_packed, g * hw)

    row_bytes = g * hw * elem_bytes
    tm = _choose_row_tile(rows_packed, row_bytes)
    n_steps = pl.cdiv(rows_packed, tm)   # ragged last tile: OOB reads are
                                         # undefined, OOB writes are dropped.

    kernel = functools.partial(_gem_kernel, eps=float(eps),
                               inv_hw=1.0 / float(hw), n_seg=g)

    # p is scalar-prefetched; every index_map receives its SMEM ref last.
    in_specs = [pl.BlockSpec((tm, g * hw), lambda i, p_ref: (i, 0))]
    operands = [xf]
    if g > 1:
        # 0/1 segment-indicator matrix (g*hw, g): column j selects segment j.
        seg = (jnp.arange(g * hw, dtype=jnp.int32)[:, None] // hw
               == jnp.arange(g, dtype=jnp.int32)[None, :]).astype(jnp.float32)
        # Constant block index -> DMA'd once, not re-copied every grid step.
        in_specs.append(pl.BlockSpec((g * hw, g), lambda i, p_ref: (0, 0)))
        operands.append(seg)
    out_specs = pl.BlockSpec((tm, g), lambda i, p_ref: (i, 0))

    # VMEM budget: double-buffered input tile dominates; clamp to 48 MiB so
    # the request also fits v7x's 64 MiB physical VMEM.
    need = 2 * tm * row_bytes + 2 * tm * g * elem_bytes
    if g > 1:
        need += 2 * g * hw * g * 4
    vmem_limit = int(min(max(32 * 1024 * 1024, need + (2 << 20)),
                         48 * 1024 * 1024))
    # TODO(synk): for huge H*W (8-row double-buffered tile > ~48 MiB) split H*W
    # into an inner "arbitrary" reduction grid axis with a VMEM accumulator.

    out = pl.pallas_call(
        kernel,
        out_shape=jax.ShapeDtypeStruct((rows_packed, g), x.dtype),
        grid_spec=pltpu.PrefetchScalarGridSpec(
            num_scalar_prefetch=1,
            grid=(n_steps,),
            in_specs=in_specs,
            out_specs=out_specs,
        ),
        compiler_params=pltpu.CompilerParams(
            dimension_semantics=("parallel",),    # independent row tiles
            vmem_limit_bytes=vmem_limit,
        ),
        cost_estimate=pl.CostEstimate(
            flops=4 * rows * hw,
            transcendentals=2 * rows * hw + 2 * rows,
            bytes_accessed=rows * hw * elem_bytes + rows * elem_bytes + 4,
        ),
    )(p, *operands)

    # (rows_packed, g) flattens (C-order) to the logical row order rp*g + j.
    return out.reshape(N, C, 1, 1)


class GeM:
    """Deterministic JAX/Pallas port of the PyTorch GeM module (forward only)."""

    def __init__(self, p=3.0, eps=1e-6):
        # nn.Parameter(torch.ones(1) * p); kept as a runtime scalar since p is learned.
        self.p = jnp.ones((1,), dtype=jnp.float32) * p
        self.eps = eps

    def __call__(self, x):
        return gem_pallas(x, self.p, eps=self.eps)


def _gem_reference(x, p, eps=1e-6):
    xc = jnp.maximum(x.astype(jnp.float32), eps)
    xp = xc ** p[0]
    m = jnp.mean(xp, axis=(-2, -1), keepdims=True)
    return (m ** (1.0 / p[0])).astype(x.dtype)


if __name__ == "__main__":
    key = jax.random.PRNGKey(0)
    N, C, H, W = 2, 4, 16, 16
    x = jax.random.normal(key, (N, C, H, W), dtype=jnp.float32)

    model = GeM(p=3.0, eps=1e-6)
    y = jax.block_until_ready(model(x))

    assert y.shape == (N, C, 1, 1), y.shape

    y_ref = _gem_reference(x, model.p, model.eps)
    if not jnp.allclose(y, y_ref, atol=1e-5, rtol=1e-5):
        raise AssertionError("Pallas GeM does not match reference")

    print("KERNEL_OK")
</pallas_src>

<mosaic_0001>
module attributes {stable_mosaic.version = 11 : i64} {
  func.func @_gem_kernel(%arg0: i32, %arg1: memref<1xf32, #tpu.memory_space<smem>>, %arg2: memref<8x256xf32, #tpu.memory_space<vmem>>, %arg3: memref<8x1xf32, #tpu.memory_space<vmem>>) attributes {dimension_semantics = [#tpu.dimension_semantics<parallel>], iteration_bounds = array<i64: 1>, scalar_prefetch = 1 : i64, scratch_operands = 0 : i64, tpu.core_type = #tpu.core_type<tc>, window_params = [{transform_indices = @transform_0, window_bounds = array<i64: 8, 256>}, {transform_indices = @transform_1, window_bounds = array<i64: 8, 1>}]} {
    %c0 = arith.constant 0 : index
    %0 = memref.load %arg1[%c0] : memref<1xf32, #tpu.memory_space<smem>>
    %cst = arith.constant 1.000000e+00 : f32
    %1 = arith.divf %cst, %0 : f32
    %c0_0 = arith.constant 0 : index
    %c0_1 = arith.constant 0 : index
    %2 = vector.load %arg2[%c0_0, %c0_1] : memref<8x256xf32, #tpu.memory_space<vmem>>, vector<8x256xf32>
    %cst_2 = arith.constant 9.99999997E-7 : f32
    %3 = vector.broadcast %cst_2 : f32 to vector<8x256xf32>
    %4 = arith.maximumf %2, %3 : vector<8x256xf32>
    %5 = math.log %4 : vector<8x256xf32>
    %6 = vector.broadcast %0 : f32 to vector<8x256xf32>
    %7 = arith.mulf %5, %6 : vector<8x256xf32>
    %8 = math.exp %7 : vector<8x256xf32>
    %cst_3 = arith.constant dense<0.000000e+00> : vector<8xf32>
    %9 = vector.multi_reduction <add>, %8, %cst_3 [1] : vector<8x256xf32> to vector<8xf32>
    %10 = vector.shape_cast %9 : vector<8xf32> to vector<8x1xf32>
    %cst_4 = arith.constant 3.906250e-03 : f32
    %11 = vector.broadcast %cst_4 : f32 to vector<8x1xf32>
    %12 = arith.mulf %10, %11 : vector<8x1xf32>
    %13 = math.log %12 : vector<8x1xf32>
    %14 = vector.broadcast %1 : f32 to vector<8x1xf32>
    %15 = arith.mulf %13, %14 : vector<8x1xf32>
    %16 = math.exp %15 : vector<8x1xf32>
    %c0_5 = arith.constant 0 : index
    %c0_6 = arith.constant 0 : index
    %17 = vector.load %arg3[%c0_5, %c0_6] : memref<8x1xf32, #tpu.memory_space<vmem>>, vector<8x1xf32>
    tpu.vector_store %arg3[%c0_5, %c0_6], %16 {strides = array<i32>} : memref<8x1xf32, #tpu.memory_space<vmem>>, vector<8x1xf32>,
    return
  }
  func.func @transform_0(%arg0: i32, %arg1: memref<1xf32, #tpu.memory_space<smem>>) -> (i32, i32) {
    %c0_i32 = arith.constant 0 : i32
    %c0_i32_0 = arith.constant 0 : i32
    return %arg0, %c0_i32 : i32, i32
  }
  func.func @transform_1(%arg0: i32, %arg1: memref<1xf32, #tpu.memory_space<smem>>) -> (i32, i32) {
    %c0_i32 = arith.constant 0 : i32
    %c0_i32_0 = arith.constant 0 : i32
    return %arg0, %c0_i32 : i32, i32
  }
}

</mosaic_0001>

<llo_original>
// kernel: tpu_custom_call.1
$region0: #{tpu_custom_call.1}
  #allocation0 [shape = 'u32[]', space=smem, size = 0x4, offset = 0x4, fixed_abs, tag = 'smem constant byte address 0x4 - core index']
  #allocation1 [shape = 'u32[72,128]{1,0:T(1,128)}', space=vmem, size = 0x9000, scoped, tag = 'internal scratch']
  #allocation2 [shape = 's32[1]{0}', space=sflag, size = 0x4, scoped, tag = 'scoped memory for tpu_custom_call.1']
  #allocation3 [shape = 'f32[1]{0:T(128)S(6)}', space=smem, size = 0x200, scoped, tag = 'prefetched SMEM operand 0']
  %s0 = inlined_call_operand.<no memory space> [shape: f32[1], index: 0, kind: input, shape index: {}]
  %s1 = inlined_call_operand.hbm [shape: f32[8,256], index: 1, kind: input, shape index: {}]
  %s2 = inlined_call_operand.vmem [shape: f32[8,1], index: 2, kind: output, shape index: {}]
  %s3 = sld [smem:[#allocation0]]
  $region18: #{tpu_custom_call.1} parent=0
    _
  %s5 = ssub.s32 1, %s3
  %s6 = scalar_select 0, %s5, %s3
  %7 = sst [smem:[#allocation3]] %s0
  $region1: #{tpu_custom_call.1} parent=0
    #allocation4 [shape = 'u8[8192]{0}', space=vmem, size = 0x2000, scoped, tag = 'input window, operand 1, single buffered']
    #allocation5 [shape = 's32[1]{0}', space=sflag, size = 0x4, scoped, tag = 'scoped memory for tpu_custom_call.1']
    %8 = vsyncpa [#allocation5], 0
    // Predicated region
    $region2: #{tpu_custom_call.1} parent=1 // pred_check
      _
    $region3: #{tpu_custom_call.1} parent=1 // pred_check_branch
      %10 = sbr.rel (0) target = $region5
    $region4: #{tpu_custom_call.1} parent=1 // pred_region
      %12 = vsyncadd [#allocation5], 0
      %s14 = sshll.u32 %s1, 4
      %s15 = int_to_ptr.hbm [resolvable:$true] %s14
      %s16 = sshll.u32 [#allocation4], 4
      %s17 = int_to_ptr.vmem [resolvable:$true] %s16
      %19 = dma.hbm_to_vmem [thread:$0]  %s15, 256, %s17, [#allocation5]
    $region5: #{tpu_custom_call.1} parent=1 // pred_fallthru
      _
    // Predicated region
    $region6: #{tpu_custom_call.1} parent=1 // pred_check
      _
    $region7: #{tpu_custom_call.1} parent=1 // pred_check_branch
      %21 = sbr.rel (0) target = $region9
    $region8: #{tpu_custom_call.1} parent=1 // pred_region
      %23 = dma.done [#allocation5], 256
    $region9: #{tpu_custom_call.1} parent=1 // pred_fallthru
      _
    %s24 = sld [smem:[#allocation3]]
    %v25 = vstv %s24
    %v26 = vrcp.pop %v25
    %v27 = vmul.f32 %v25, %v26
    %v28 = vsub.f32 1.0, %v27
    %v29 = vmul.f32 %v26, %v28
    %v30 = vadd.f32 %v26, %v29
    %vm31 = vweird.f32 %v25
    %vm32 = vweird.f32 %v26
    %vm33 = vmor %vm31, %vm32
    %v34 = vsel %vm33, %v26, %v30
    %v35 = vand.u32 2147483647, %v25
    %vm36 = vcmp.eq.f32.partialorder %v35, 8.507059e+37
    %v37 = vand.u32 %v25, 2147483648
    %v38 = vor.u32 1.1754944e-38, %v37
    %v39 = vsel %vm36, %v38, %v34
    %s40 = vtos %v39
    %v41 = vld [vmem:[#allocation4] sm:$0xff]
    %v42 = vld [vmem:[#allocation4 + $0x8] sm:$0xff]
    %v43 = vmax.f32 %v41, 1e-06
    %v44 = vmax.f32 %v42, 1e-06
    %v45 = vlog2.pop %v43
    %v46 = vmul.f32 %v45, 0.6931472
    %v47 = vlog2.pop %v44
    %v48 = vmul.f32 %v47, 0.6931472
    %v49 = vstv %s24
    %v50 = vmul.f32 %v46, %v49
    %v51 = vmul.f32 %v48, %v49
    %v52 = vmul.f32 %v50, 1.442695
    %v53 = vpow.pop %v52
    %v54 = vmul.f32 %v51, 1.442695
    %v55 = vpow.pop %v54
    %v56 = vadd.f32 %v53, %v55
    %57 = vadd.xlane.f32.xlu0 %v56
    %v58 = vpop.xlane.xlu0 %57
    %v59 = vmul.f32 %v58, 0.00390625
    %v60 = vlog2.pop %v59
    %v61 = vmul.f32 %v60, 0.6931472
    %v62 = vstv %s40
    %v63 = vmul.f32 %v61, %v62
    %v64 = vmul.f32 %v63, 1.442695
    %v65 = vpow.pop %v64
    %vm66 = vcmask 7168
    %67 = vst.msk [vmem:[%s2] sm:$0xff] %vm66, %v65
    // Predicated region
    $region10: #{tpu_custom_call.1} parent=1 // pred_check
      _
    $region11: #{tpu_custom_call.1} parent=1 // pred_check_branch
      %69 = sbr.rel (0) target = $region13
    $region12: #{tpu_custom_call.1} parent=1 // pred_region
      _
    $region13: #{tpu_custom_call.1} parent=1 // pred_fallthru
      _
    // Predicated region
    $region14: #{tpu_custom_call.1} parent=1 // pred_check
      _
    $region15: #{tpu_custom_call.1} parent=1 // pred_check_branch
      %71 = sbr.rel (0) target = $region17
    $region16: #{tpu_custom_call.1} parent=1 // pred_region
      _
    $region17: #{tpu_custom_call.1} parent=1 // pred_fallthru
      _
    %72 = vsyncpa [#allocation5], 1

</llo_original>
